<compile_context>
chip_gen: v5e
topology: v5e:2x2
jax: 0.10.0
libtpu: 0.0.40
codegen_flags: <defaults>
</compile_context>

<pallas_src>
import functools

import jax
import jax.numpy as jnp
from jax import lax
from jax.experimental import pallas as pl
from jax.experimental.pallas import tpu as pltpu

LANES = 128                            # lane width; last dim of every block
MAX_BLOCK_ROWS = 4096                  # 4096*128*4 B = 2 MiB input block (pass 2: 4 MiB/step)
FUSED_MAX_BYTES = 2 * 1024 * 1024      # whole-array-in-VMEM path for inputs up to 2 MiB
VMEM_LIMIT_BYTES = 32 * 1024 * 1024    # explicit scoped-VMEM limit, safe on v5e/v6e/v7x

_SMEM = pl.BlockSpec(memory_space=pltpu.MemorySpace.SMEM)
_VMEM = pl.BlockSpec(memory_space=pltpu.MemorySpace.VMEM)


def _mix(x, c_neg, c_pos, c_hsw):
    """Folded activation mix: a0*x + a1*relu(x) + a2*hardswish(x) + a3*prelu(x)."""
    slope = jnp.where(x > 0.0, c_pos, c_neg)
    return x * (slope + c_hsw * jnp.clip(x + 3.0, 0.0, 6.0))


# ---------------------------------------------------------------------------
# Fused path: whole array resident in VMEM (2N HBM traffic, exact variance).
# ---------------------------------------------------------------------------
def _fused_kernel(coef_ref, x_ref, o_ref, *, n_elems, eps, masked):
    c_neg, c_pos, c_hsw = coef_ref[0], coef_ref[1], coef_ref[2]
    gamma, beta = coef_ref[3], coef_ref[4]
    y = _mix(x_ref[...], c_neg, c_pos, c_hsw)
    inv_n = 1.0 / float(n_elems)
    # Zero-padded tail elements give y == mix(0) == 0 -> they do not bias the sum.
    mean = jnp.sum(y) * inv_n
    d = y - mean
    if masked:  # static: lane padding present -> exclude pad positions from the variance
        row_id = lax.broadcasted_iota(jnp.int32, y.shape, 0)
        lane_id = lax.broadcasted_iota(jnp.int32, y.shape, 1)
        d = jnp.where(row_id * LANES + lane_id < n_elems, d, 0.0)
    var = jnp.sum(d * d) * inv_n
    scale = gamma * lax.rsqrt(var + eps)
    o_ref[...] = y * scale + (beta - mean * scale)


# ---------------------------------------------------------------------------
# Two-pass path, pass 1: per-block partial sums of d = y - K and d*d.
# Each grid step writes its own (8, LANES) partial -> no cross-step accumulator,
# so the grid axis is "parallel" (both TensorCores on v7x).
# ---------------------------------------------------------------------------
def _stats_kernel(coef_ref, x_ref, s_ref, q_ref, *,
                  rows, block_rows, n_elems, mask_mode):
    c_neg, c_pos, c_hsw, k_shift = (coef_ref[0], coef_ref[1],
                                    coef_ref[2], coef_ref[3])
    d = _mix(x_ref[...], c_neg, c_pos, c_hsw) - k_shift
    if mask_mode:  # static: only compiled for padded / ragged inputs
        i = pl.program_id(0)
        row_id = lax.broadcasted_iota(jnp.int32, d.shape, 0) + i * block_rows
        if mask_mode == 2:   # lane padding present: exact flat-element mask
            lane_id = lax.broadcasted_iota(jnp.int32, d.shape, 1)
            valid = row_id * LANES + lane_id < n_elems
        else:                # only ragged grid overhang: row mask suffices
            valid = row_id < rows
        d = jnp.where(valid, d, 0.0)   # also squashes garbage/NaN in the overhang rows
    # Column reductions on the MXU (vector-extended slot) instead of VPU add trees:
    # keeps pass 1 off the VALU critical path on v7x; the MXU is idle here anyway.
    ones = jnp.ones((8, d.shape[0]), dtype=jnp.float32)
    s_ref[...] = jnp.dot(ones, d,
                         preferred_element_type=jnp.float32).reshape(1, 8, LANES)
    q_ref[...] = jnp.dot(ones, d * d,
                         preferred_element_type=jnp.float32).reshape(1, 8, LANES)


# ---------------------------------------------------------------------------
# Two-pass path, pass 2: recompute the cheap mix and apply the BN affine transform.
# ---------------------------------------------------------------------------
def _norm_kernel(p_ref, x_ref, o_ref):
    c_neg, c_pos, c_hsw = p_ref[0], p_ref[1], p_ref[2]
    scale, shift = p_ref[3], p_ref[4]
    y = _mix(x_ref[...], c_neg, c_pos, c_hsw)
    o_ref[...] = y * scale + shift


def repact_bn(x, actor_atn, prelu_w, gamma=1.0, beta=0.0, eps=1e-5, *,
              block_rows=None, fused_max_bytes=FUSED_MAX_BYTES):
    """RepAct_BN.forward.  x: any shape (NCHW in the reference).  Returns flat 1-D f32."""
    n_elems = x.size
    xf = x.reshape(-1).astype(jnp.float32)

    rows = pl.cdiv(n_elems, LANES)
    pad = rows * LANES - n_elems
    n_padded = rows * LANES

    # Fold PReLU into the linear mix and 1/6 into the hardswish coefficient.
    a = actor_atn.astype(jnp.float32).reshape(-1)
    pw = prelu_w.astype(jnp.float32).reshape(-1)[0]
    c_neg = a[0] + a[3] * pw          # slope for x <= 0 (relu contributes 0, prelu folded)
    c_pos = a[0] + a[1] + a[3]        # slope for x >  0
    c_hsw = a[2] * (1.0 / 6.0)        # hardswish coefficient
    gamma = jnp.asarray(gamma, jnp.float32)
    beta = jnp.asarray(beta, jnp.float32)

    xp = jnp.pad(xf, (0, pad)) if pad else xf   # static; no copy for lane-aligned inputs
    x2 = xp.reshape(rows, LANES)

    # ---- Fused single-kernel path: whole slab resident in VMEM, 2N HBM traffic. ----
    if n_elems * 4 <= fused_max_bytes:
        coef = jnp.stack([c_neg, c_pos, c_hsw, gamma, beta])
        out2 = pl.pallas_call(
            functools.partial(_fused_kernel, n_elems=n_elems, eps=float(eps),
                              masked=bool(pad)),
            out_shape=jax.ShapeDtypeStruct((rows, LANES), jnp.float32),
            in_specs=[_SMEM, _VMEM],
            out_specs=_VMEM,
            compiler_params=pltpu.CompilerParams(vmem_limit_bytes=VMEM_LIMIT_BYTES),
        )(coef, x2)
        out = out2.reshape(-1)
        return out[:n_elems] if pad else out

    # ---- Two-pass pipelined path. ----
    if block_rows is None:
        block_rows = MAX_BLOCK_ROWS
    block_rows = min(block_rows, rows)        # callers keep this a multiple of 8
    n_blocks = pl.cdiv(rows, block_rows)
    ragged = (rows % block_rows) != 0
    mask_mode = 2 if pad else (1 if ragged else 0)

    # Cheap data-dependent shift K ~ E[y] so the sum-of-squares does not cancel
    # catastrophically for non-zero-mean activations.
    n_sample = min(n_elems, 1024)
    k_shift = jnp.mean(_mix(xf[:n_sample], c_neg, c_pos, c_hsw))

    x_spec = pl.BlockSpec((block_rows, LANES), lambda i: (i, 0))
    part_spec = pl.BlockSpec((1, 8, LANES), lambda i: (i, 0, 0))

    # Pass 1: per-block partial sums (parallel grid -> both TensorCores on v7x).
    coef1 = jnp.stack([c_neg, c_pos, c_hsw, k_shift])
    s_part, q_part = pl.pallas_call(
        functools.partial(_stats_kernel, rows=rows, block_rows=block_rows,
                          n_elems=n_elems, mask_mode=mask_mode),
        out_shape=(jax.ShapeDtypeStruct((n_blocks, 8, LANES), jnp.float32),
                   jax.ShapeDtypeStruct((n_blocks, 8, LANES), jnp.float32)),
        grid=(n_blocks,),
        in_specs=[_SMEM, x_spec],
        out_specs=(part_spec, part_spec),
        compiler_params=pltpu.CompilerParams(
            dimension_semantics=("parallel",),
            vmem_limit_bytes=VMEM_LIMIT_BYTES),
        cost_estimate=pl.CostEstimate(flops=14 * n_padded, transcendentals=0,
                                      bytes_accessed=4 * n_padded),
    )(coef1, x2)

    # Tiny final reduction + BN scale/shift in plain XLA (a few KiB of partials).
    inv_n = 1.0 / float(n_elems)
    sum_d = jnp.sum(s_part[:, 0, :])
    sum_d2 = jnp.sum(q_part[:, 0, :])
    mean_d = sum_d * inv_n
    mean = k_shift + mean_d
    var = jnp.maximum(sum_d2 * inv_n - mean_d * mean_d, 0.0)   # guard tiny negative
    scale = gamma * lax.rsqrt(var + eps)
    shift = beta - mean * scale

    # Pass 2: recompute the mix and normalize.  Write in place over x2 when it is a
    # fresh intermediate (padded or dtype-cast); aliasing the jit entry param would
    # just force XLA to insert a defensive copy, so skip it in that case.
    params2 = jnp.stack([c_neg, c_pos, c_hsw, scale, shift])
    alias = {1: 0} if (pad or x.dtype != jnp.float32) else {}
    out2 = pl.pallas_call(
        _norm_kernel,
        out_shape=jax.ShapeDtypeStruct((rows, LANES), jnp.float32),
        grid=(n_blocks,),
        in_specs=[_SMEM, x_spec],
        out_specs=x_spec,
        input_output_aliases=alias,
        compiler_params=pltpu.CompilerParams(
            dimension_semantics=("parallel",),
            vmem_limit_bytes=VMEM_LIMIT_BYTES),
        cost_estimate=pl.CostEstimate(flops=9 * n_padded, transcendentals=0,
                                      bytes_accessed=8 * n_padded),
    )(params2, x2)

    out = out2.reshape(-1)
    return out[:n_elems] if pad else out


def _reference(x, actor_atn, prelu_w, eps=1e-5):
    """Pure-JAX reference mirroring the PyTorch forward (training-mode BN)."""
    xf = x.reshape(-1).astype(jnp.float32)
    y = (actor_atn[0] * xf
         + actor_atn[1] * jnp.maximum(xf, 0.0)
         + actor_atn[2] * (xf * jnp.clip(xf + 3.0, 0.0, 6.0) / 6.0)
         + actor_atn[3] * jnp.where(xf > 0.0, xf, prelu_w[0] * xf))
    m = jnp.mean(y)
    v = jnp.mean((y - m) ** 2)   # biased variance, as BN uses for normalization
    return (y - m) / jnp.sqrt(v + eps)


if __name__ == "__main__":
    key = jax.random.PRNGKey(0)
    k0, k1 = jax.random.split(key)

    actor_atn = jnp.array([0.5, 1.0, 0.25, 0.75], jnp.float32)  # initWeight
    prelu_w = jnp.array([0.25], jnp.float32)                    # nn.PReLU default
    # BatchNorm2d(1) default affine gamma=1, beta=0 are the wrapper defaults.

    # 1) Module-sized NCHW input (2*4*16*16 = 2048 elems) -> fused single-kernel path.
    x = jax.random.uniform(k0, (2, 4, 16, 16), jnp.float32, minval=-5.0, maxval=5.0)
    out = jax.block_until_ready(jax.jit(repact_bn)(x, actor_atn, prelu_w))
    ref = _reference(x, actor_atn, prelu_w)
    assert out.shape == ref.shape
    assert jnp.allclose(out, ref, rtol=1e-4, atol=1e-4), "fused path mismatch"

    # 2) Exercise the two-pass pipelined path with a ragged, non-lane-aligned size
    #    (2*4*93*95 = 70680 elems -> 553 rows, pad=104, two blocks of 512 rows).
    xb = jax.random.uniform(k1, (2, 4, 93, 95), jnp.float32, minval=-5.0, maxval=5.0)
    fwd_tp = jax.jit(functools.partial(repact_bn, fused_max_bytes=0, block_rows=512))
    out_b = jax.block_until_ready(fwd_tp(xb, actor_atn, prelu_w))
    ref_b = _reference(xb, actor_atn, prelu_w)
    assert jnp.allclose(out_b, ref_b, rtol=1e-4, atol=1e-4), "two-pass (masked) mismatch"

    # 3) Two-pass path, aligned / unmasked variant (16 rows -> two blocks of 8 rows).
    fwd_al = jax.jit(functools.partial(repact_bn, fused_max_bytes=0, block_rows=8))
    out_c = jax.block_until_ready(fwd_al(x, actor_atn, prelu_w))
    assert jnp.allclose(out_c, ref, rtol=1e-4, atol=1e-4), "two-pass (aligned) mismatch"

    print("KERNEL_OK")
</pallas_src>

<mosaic_0001>
module attributes {stable_mosaic.version = 11 : i64} {
  func.func @_fused_kernel(%arg0: memref<5xf32, #tpu.memory_space<smem>>, %arg1: memref<16x128xf32, #tpu.memory_space<vmem>>, %arg2: memref<16x128xf32, #tpu.memory_space<vmem>>) attributes {dimension_semantics = [], scalar_prefetch = 0 : i64, scratch_operands = 0 : i64, tpu.core_type = #tpu.core_type<tc>} {
    %c0 = arith.constant 0 : index
    %0 = memref.load %arg0[%c0] : memref<5xf32, #tpu.memory_space<smem>>
    %c1 = arith.constant 1 : index
    %1 = memref.load %arg0[%c1] : memref<5xf32, #tpu.memory_space<smem>>
    %c2 = arith.constant 2 : index
    %2 = memref.load %arg0[%c2] : memref<5xf32, #tpu.memory_space<smem>>
    %c3 = arith.constant 3 : index
    %3 = memref.load %arg0[%c3] : memref<5xf32, #tpu.memory_space<smem>>
    %c4 = arith.constant 4 : index
    %4 = memref.load %arg0[%c4] : memref<5xf32, #tpu.memory_space<smem>>
    %c0_0 = arith.constant 0 : index
    %c0_1 = arith.constant 0 : index
    %5 = vector.load %arg1[%c0_0, %c0_1] : memref<16x128xf32, #tpu.memory_space<vmem>>, vector<16x128xf32>
    %cst = arith.constant 0.000000e+00 : f32
    %6 = vector.broadcast %cst : f32 to vector<16x128xf32>
    %7 = arith.cmpf ogt, %5, %6 : vector<16x128xf32>
    %8 = vector.broadcast %1 : f32 to vector<16x128xf32>
    %9 = vector.broadcast %0 : f32 to vector<16x128xf32>
    %10 = arith.select %7, %8, %9 : vector<16x128xi1>, vector<16x128xf32>
    %cst_2 = arith.constant 3.000000e+00 : f32
    %11 = vector.broadcast %cst_2 : f32 to vector<16x128xf32>
    %12 = arith.addf %5, %11 : vector<16x128xf32>
    %cst_3 = arith.constant 0.000000e+00 : f32
    %cst_4 = arith.constant 6.000000e+00 : f32
    %13 = vector.broadcast %cst_3 : f32 to vector<16x128xf32>
    %14 = arith.maximumf %13, %12 : vector<16x128xf32>
    %15 = vector.broadcast %cst_4 : f32 to vector<16x128xf32>
    %16 = arith.minimumf %15, %14 : vector<16x128xf32>
    %17 = vector.broadcast %2 : f32 to vector<16x128xf32>
    %18 = arith.mulf %17, %16 : vector<16x128xf32>
    %19 = arith.addf %10, %18 : vector<16x128xf32>
    %20 = arith.mulf %5, %19 : vector<16x128xf32>
    %21 = vector.shape_cast %20 : vector<16x128xf32> to vector<1x16x128xf32>
    %cst_5 = arith.constant dense<0.000000e+00> : vector<1xf32>
    %22 = vector.multi_reduction <add>, %21, %cst_5 [1, 2] : vector<1x16x128xf32> to vector<1xf32>
    %23 = vector.shape_cast %22 : vector<1xf32> to vector<1x1x1xf32>
    %24 = vector.extract %23[0, 0, 0] : f32 from vector<1x1x1xf32>
    %cst_6 = arith.constant 4.8828125E-4 : f32
    %25 = arith.mulf %24, %cst_6 : f32
    %26 = vector.broadcast %25 : f32 to vector<16x128xf32>
    %27 = arith.subf %20, %26 : vector<16x128xf32>
    %28 = arith.mulf %27, %27 : vector<16x128xf32>
    %29 = vector.shape_cast %28 : vector<16x128xf32> to vector<1x16x128xf32>
    %cst_7 = arith.constant dense<0.000000e+00> : vector<1xf32>
    %30 = vector.multi_reduction <add>, %29, %cst_7 [1, 2] : vector<1x16x128xf32> to vector<1xf32>
    %31 = vector.shape_cast %30 : vector<1xf32> to vector<1x1x1xf32>
    %32 = vector.extract %31[0, 0, 0] : f32 from vector<1x1x1xf32>
    %cst_8 = arith.constant 4.8828125E-4 : f32
    %33 = arith.mulf %32, %cst_8 : f32
    %cst_9 = arith.constant 9.99999974E-6 : f32
    %34 = arith.addf %33, %cst_9 : f32
    %35 = math.rsqrt %34 : f32
    %36 = arith.mulf %3, %35 : f32
    %37 = vector.broadcast %36 : f32 to vector<16x128xf32>
    %38 = arith.mulf %20, %37 : vector<16x128xf32>
    %39 = arith.mulf %25, %36 : f32
    %40 = arith.subf %4, %39 : f32
    %41 = vector.broadcast %40 : f32 to vector<16x128xf32>
    %42 = arith.addf %38, %41 : vector<16x128xf32>
    %c0_10 = arith.constant 0 : index
    %c0_11 = arith.constant 0 : index
    %43 = vector.load %arg2[%c0_10, %c0_11] : memref<16x128xf32, #tpu.memory_space<vmem>>, vector<16x128xf32>
    tpu.vector_store %arg2[%c0_10, %c0_11], %42 {strides = array<i32>} : memref<16x128xf32, #tpu.memory_space<vmem>>, vector<16x128xf32>,
    return
  }
}

</mosaic_0001>

<llo_original>
// kernel: repact_bn.1
$region0: #{repact_bn.1}
  #allocation0 [shape = 'u32[]', space=smem, size = 0x4, offset = 0x4, fixed_abs, tag = 'smem constant byte address 0x4 - core index']
  #allocation1 [shape = 'u32[72,128]{1,0:T(1,128)}', space=vmem, size = 0x9000, scoped, tag = 'internal scratch']
  %s0 = inlined_call_operand.vmem [shape: f32[5], index: 0, kind: input, shape index: {}]
  %s1 = inlined_call_operand.vmem [shape: f32[16,128], index: 1, kind: input, shape index: {}]
  %s2 = inlined_call_operand.hbm [shape: f32[16,128], index: 2, kind: output, shape index: {}]
  %s3 = sld [smem:[#allocation0]]
  $region22: #{repact_bn.1} parent=0
    _
  %s5 = ssub.s32 1, %s3
  %s6 = scalar_select 0, %s5, %s3
  $region1: #{repact_bn.1} parent=0
    #allocation2 [shape = 'u8[512]{0}', space=smem, size = 0x200, scoped, tag = 'input window, operand 0, single buffered']
    #allocation3 [shape = 's32[1]{0}', space=sflag, size = 0x4, scoped, tag = 'scoped memory for repact_bn.1']
    #allocation4 [shape = 's32[1]{0}', space=sflag, size = 0x4, scoped, tag = 'scoped memory for repact_bn.1']
    #allocation5 [shape = 'u8[8192]{0}', space=vmem, size = 0x2000, scoped, tag = 'output window, operand 0, single buffered']
    %7 = vsyncpa [#allocation4], 0
    %8 = vsyncpa [#allocation3], 0
    // Predicated region
    $region2: #{repact_bn.1} parent=1 // pred_check
      _
    $region3: #{repact_bn.1} parent=1 // pred_check_branch
      %10 = sbr.rel (0) target = $region5
    $region4: #{repact_bn.1} parent=1 // pred_region
      %12 = vsyncadd [#allocation4], 0
      %s14 = sshll.u32 %s0, 4
      %s15 = int_to_ptr.vmem [resolvable:$true] %s14
      %17 = dma.vmem_to_smem %s15, 16, [#allocation2], [#allocation4]
    $region5: #{repact_bn.1} parent=1 // pred_fallthru
      _
    // Predicated region
    $region6: #{repact_bn.1} parent=1 // pred_check
      _
    $region7: #{repact_bn.1} parent=1 // pred_check_branch
      %19 = sbr.rel (0) target = $region9
    $region8: #{repact_bn.1} parent=1 // pred_region
      _
    $region9: #{repact_bn.1} parent=1 // pred_fallthru
      _
    // Predicated region
    $region10: #{repact_bn.1} parent=1 // pred_check
      _
    $region11: #{repact_bn.1} parent=1 // pred_check_branch
      %21 = sbr.rel (0) target = $region13
    $region12: #{repact_bn.1} parent=1 // pred_region
      %23 = dma.done [#allocation4], 16
    $region13: #{repact_bn.1} parent=1 // pred_fallthru
      _
    %24 = sfence
    %s25 = sld [smem:[#allocation2]]
    %s26 = sld [smem:[#allocation2 + $0x1]]
    %s27 = sld [smem:[#allocation2 + $0x2]]
    %s28 = sld [smem:[#allocation2 + $0x3]]
    %s29 = sld [smem:[#allocation2 + $0x4]]
    %v30 = vld [vmem:[%s1] sm:$0xff]
    %v31 = vld [vmem:[%s1 + $0x8] sm:$0xff]
    %vm32 = vcmp.gt.f32.partialorder %v30, 0.0
    %vm33 = vcmp.gt.f32.partialorder %v31, 0.0
    %v34 = vstv %s26
    %v35 = vstv %s25
    %v36 = vsel %vm32, %v34, %v35
    %v37 = vsel %vm33, %v34, %v35
    %v38 = vadd.f32 %v30, 3.0
    %v39 = vadd.f32 %v31, 3.0
    %v40 = vmax.f32 %v38, 0.0
    %v41 = vmax.f32 %v39, 0.0
    %v42 = vmin.f32 %v40, 6.0
    %v43 = vmin.f32 %v41, 6.0
    %v44 = vstv %s27
    %v45 = vmul.f32 %v44, %v42
    %v46 = vmul.f32 %v44, %v43
    %v47 = vadd.f32 %v36, %v45
    %v48 = vadd.f32 %v37, %v46
    %v49 = vmul.f32 %v30, %v47
    %v50 = vmul.f32 %v31, %v48
    %v51 = vadd.f32 %v49, %v50
    %52 = vadd.xlane.f32.xlu0 %v51
    %v53 = vpop.xlane.xlu0 %52
    %v54 = vrot.slane %v53, 4
    %v55 = vadd.f32 %v53, %v54
    %v56 = vrot.slane %v55, 2
    %v57 = vadd.f32 %v55, %v56
    %v58 = vrot.slane %v57, 1
    %v59 = vadd.f32 %v57, %v58
    %s60 = vtos %v59
    %s61 = smul.f32 %s60, 0.00048828125
    %v62 = vstv %s61
    %v63 = vsub.f32 %v49, %v62
    %v64 = vsub.f32 %v50, %v62
    %v65 = vmul.f32 %v63, %v63
    %v66 = vmul.f32 %v64, %v64
    %v67 = vadd.f32 %v65, %v66
    %68 = vadd.xlane.f32.xlu0 %v67
    %v69 = vpop.xlane.xlu0 %68
    %v70 = vrot.slane %v69, 4
    %v71 = vadd.f32 %v69, %v70
    %v72 = vrot.slane %v71, 2
    %v73 = vadd.f32 %v71, %v72
    %v74 = vrot.slane %v73, 1
    %v75 = vadd.f32 %v73, %v74
    %s76 = vtos %v75
    %s77 = smul.f32 %s76, 0.00048828125
    %s78 = sadd.f32 %s77, 1e-05
    %v79 = vstv %s78
    %v80 = vrsqrt.pop %v79
    %v81 = vmul.f32 %v80, %v79
    %v82 = vmul.f32 %v81, %v80
    %v83 = vmul.f32 0.5, %v82
    %v84 = vsub.f32 1.5, %v83
    %v85 = vmul.f32 %v80, %v84
    %vm86 = vweird.f32 %v79
    %vm87 = vweird.f32 %v80
    %vm88 = vmor %vm86, %vm87
    %v89 = vsel %vm88, %v80, %v85
    %s90 = vtos %v89
    %s91 = smul.f32 %s28, %s90
    %v92 = vstv %s91
    %v93 = vmul.f32 %v49, %v92
    %v94 = vmul.f32 %v50, %v92
    %s95 = smul.f32 %s61, %s91
    %s96 = ssub.f32 %s29, %s95
    %v97 = vstv %s96
    %v98 = vadd.f32 %v93, %v97
    %v99 = vadd.f32 %v94, %v97
    %100 = vst [vmem:[#allocation5] sm:$0xff] %v98
    %101 = vst [vmem:[#allocation5 + $0x8] sm:$0xff] %v99
    // Predicated region
    $region14: #{repact_bn.1} parent=1 // pred_check
      _
    $region15: #{repact_bn.1} parent=1 // pred_check_branch
      %103 = sbr.rel (0) target = $region17
    $region16: #{repact_bn.1} parent=1 // pred_region
      %105 = vsyncadd [#allocation3], 0
      %s106 = sshll.u32 [#allocation5], 4
      %s107 = int_to_ptr.vmem [resolvable:$true] %s106
      %s108 = sshll.u32 %s2, 4
      %s109 = int_to_ptr.hbm [resolvable:$true] %s108
      %114 = dma.vmem_to_hbm [thread:$0]  %s107, 256, %s109, [#allocation3], 128, 128, 8
    $region17: #{repact_bn.1} parent=1 // pred_fallthru
      _
    // Predicated region
    $region18: #{repact_bn.1} parent=1 // pred_check
      _
    $region19: #{repact_bn.1} parent=1 // pred_check_branch
      %116 = sbr.rel (0) target = $region21
    $region20: #{repact_bn.1} parent=1 // pred_region
      %118 = dma.done [#allocation3], 256
    $region21: #{repact_bn.1} parent=1 // pred_fallthru
      _
    %119 = vsyncpa [#allocation3], 1
    %120 = vsyncpa [#allocation4], 1

</llo_original>
